<compile_context>
chip_gen: v7x
topology: tpu7x:2x2x1
jax: 0.10.0
libtpu: 0.0.40
codegen_flags: <defaults>
</compile_context>

<pallas_src>
from functools import partial

import jax
import jax.numpy as jnp
from jax.experimental import pallas as pl
from jax.experimental.pallas import tpu as pltpu


def _focal_loss_kernel(x_ref, tgt_ref, alpha_ref, out_ref, *,
                       gamma, n_true, tile_n):
    s = pl.program_id(0)                    # split axis ("parallel"; 2 TCs on v7x)
    t = pl.program_id(1)                    # reduction axis over row tiles
    tiles_per_split = pl.num_programs(1)

    # Zero this split's resident accumulator block on its first tile.
    @pl.when(t == 0)
    def _init():
        out_ref[...] = jnp.zeros_like(out_ref)

    x = x_ref[...]                                   # (tile_n, C), native dtype
    tgt = tgt_ref[...]                               # (tile_n, 1), int32
    alpha_n = alpha_ref[...].astype(jnp.float32)     # (tile_n, 1)

    tn, c = x.shape

    # probs = sum(P * one_hot(targets), classes) via a direct select over the
    # class (lane) axis; exact in the input dtype (exactly one nonzero per
    # row), widen only the reduced column to f32.
    cls = jax.lax.broadcasted_iota(jnp.int32, (tn, c), 1)
    sel = jnp.where(cls == tgt, x, 0.0)
    probs = jnp.sum(sel, axis=1, keepdims=True).astype(jnp.float32)   # (tn, 1)

    # Row validity: masks the overhanging part of the last tile and any fully
    # out-of-range blocks (no wrapper-side padding).
    row = jax.lax.broadcasted_iota(jnp.int32, (tn, 1), 0)
    row_global = (s * tiles_per_split + t) * tile_n + row
    valid = row_global < n_true                                        # (tn, 1)

    # Guard log() only on invalid rows; real rows keep the module's exact
    # semantics (probs == 0 -> -inf, same as torch).
    probs = jnp.where(valid, probs, 1.0)
    log_p = jnp.log(probs)
    one_minus = 1.0 - probs

    # (1 - p) ** gamma
    if float(gamma) == int(gamma) and 0 <= int(gamma) <= 64:
        g = int(gamma)
        if g == 0:
            mod = jnp.ones_like(one_minus)
        else:                               # square-and-multiply, VPU only
            mod = None
            base = one_minus
            while g:
                if g & 1:
                    mod = base if mod is None else mod * base
                g >>= 1
                if g:
                    base = base * base
    else:
        # exp(gamma * log(x)): x == 0 -> 0, x < 0 -> NaN, matching torch.pow.
        mod = jnp.exp(float(gamma) * jnp.log(one_minus))

    batch_loss = jnp.where(valid, -alpha_n * mod * log_p, 0.0)         # (tn, 1)

    # Per-split partial sum; wrapper combines splits and divides by true N.
    out_ref[...] += jnp.sum(batch_loss)


def _num_tensorcores():
    try:
        info = pltpu.get_tpu_info()
    except Exception:
        return 1
    for attr in ("num_cores", "core_count", "num_tensorcores"):
        v = getattr(info, attr, None)
        if v:
            try:
                return max(1, int(v))
            except Exception:
                pass
    return 1


def _vmem_capacity_bytes():
    try:
        return int(pltpu.get_tpu_info().vmem_capacity_bytes)
    except Exception:
        return 64 << 20      # v7x per-TC physical VMEM: most conservative default


def focal_loss(inputs, targets, alpha, gamma=2.0, size_average=True,
               tile_n=None, num_splits=None):
    """inputs: (N, C) probabilities (native dtype, natural layout);
    targets: (N,) int class ids; alpha: (C,) or (C, 1) per-class weights."""
    N, C = inputs.shape
    itemsize = jnp.dtype(inputs.dtype).itemsize

    # Cheap wrapper-side plumbing only (NO transpose / pad of the N x C array).
    tgt = targets.reshape(N, 1).astype(jnp.int32)                       # (N, 1)
    alpha_n = jnp.ravel(alpha).astype(jnp.float32)[
        targets.astype(jnp.int32)].reshape(N, 1)                        # (N, 1)

    # --- tile sizing: VMEM-aware, accounts for lane padding + 2x buffering ---
    lanes_x = pl.cdiv(C, 128) * 128                       # VMEM lane padding
    vmem_row_bytes = lanes_x * itemsize + 128 * 4 + 128 * 4   # x + tgt + alpha_n
    if tile_n is None:
        # ~1/16 of physical VMEM per pipeline buffer (2 buffers used below):
        # v5e/v6e (128 MiB) -> 8 MiB tiles, v7x (64 MiB) -> 4 MiB tiles.
        budget = min(8 << 20, max(2 << 20, _vmem_capacity_bytes() // 16))
        tile_n = max(8, (budget // vmem_row_bytes) // 8 * 8)
    if N >= 8:
        tile_n = min(tile_n, (N // 8) * 8)   # multiple of 8, block <= array dim
    else:
        tile_n = N                            # tiny batch: one full-extent block
    tiles_total = pl.cdiv(N, tile_n)

    if num_splits is None:
        num_splits = _num_tensorcores()       # 1 on v5e/v6e, 2 on v7x
    num_splits = max(1, min(int(num_splits), tiles_total))
    tiles_per_split = pl.cdiv(tiles_total, num_splits)

    kernel = partial(_focal_loss_kernel, gamma=gamma, n_true=N, tile_n=tile_n)

    # Clamp the block index so "extra" slots (when tiles_total % num_splits
    # != 0) never index past the array; their rows are masked in-kernel.
    def row_map(s, t, _tps=tiles_per_split, _nt=tiles_total):
        return (jnp.minimum(s * _tps + t, _nt - 1), 0)

    partials = pl.pallas_call(
        kernel,
        out_shape=jax.ShapeDtypeStruct((num_splits, 1, 128), jnp.float32),
        grid_spec=pltpu.PrefetchScalarGridSpec(
            num_scalar_prefetch=0,
            grid=(num_splits, tiles_per_split),
            in_specs=[
                pl.BlockSpec((tile_n, C), row_map),   # contiguous (N, C) blocks
                pl.BlockSpec((tile_n, 1), row_map),   # targets column
                pl.BlockSpec((tile_n, 1), row_map),   # alpha[targets] column
            ],
            out_specs=pl.BlockSpec((1, 1, 128), lambda s, t: (s, 0, 0)),
        ),
        compiler_params=pltpu.CompilerParams(
            dimension_semantics=("parallel", "arbitrary"),
            vmem_limit_bytes=32 * 1024 * 1024),
        cost_estimate=pl.CostEstimate(
            flops=4 * N * C + 12 * N,
            transcendentals=2 * N,
            bytes_accessed=N * C * itemsize + 8 * N + num_splits * 128 * 4),
    )(inputs, tgt, alpha_n)

    total = jnp.sum(partials[:, 0, 0])
    return total / N if size_average else total


def focal_loss_ref(inputs, targets, alpha, gamma=2.0, size_average=True):
    # Pure-JAX reference mirroring the PyTorch forward exactly.
    N, C = inputs.shape
    class_mask = jax.nn.one_hot(targets, C, dtype=inputs.dtype)
    alpha_n = jnp.ravel(alpha)[targets].reshape(N, 1)
    probs = jnp.sum(inputs * class_mask, axis=1).reshape(N, 1)
    log_p = jnp.log(probs)
    batch_loss = -alpha_n * jnp.power(1.0 - probs, gamma) * log_p
    return jnp.mean(batch_loss) if size_average else jnp.sum(batch_loss)


if __name__ == "__main__":
    key = jax.random.PRNGKey(0)
    k1, k2, k3, k4 = jax.random.split(key, 4)

    # --- Config 1: module defaults (alpha=None -> ones, gamma=2, mean). ---
    N, class_num = 8, 16
    # The module consumes probabilities directly (it calls .log() on them),
    # so build valid probabilities via softmax of random logits.
    logits = jax.random.normal(k1, (N, class_num), dtype=jnp.float32)
    inputs = jax.nn.softmax(logits, axis=-1)
    targets = jax.random.randint(k2, (N,), 0, class_num, dtype=jnp.int32)
    alpha = jnp.ones((class_num,), dtype=jnp.float32)   # alpha=None path

    loss = jax.block_until_ready(
        focal_loss(inputs, targets, alpha, gamma=2.0, size_average=True))
    ref = focal_loss_ref(inputs, targets, alpha, gamma=2.0, size_average=True)
    assert jnp.allclose(loss, ref, rtol=1e-5, atol=1e-6), (loss, ref)

    # --- Config 2: non-integer gamma + sum reduction (exp/log path). ---
    loss2 = jax.block_until_ready(
        focal_loss(inputs, targets, alpha, gamma=2.5, size_average=False))
    ref2 = focal_loss_ref(inputs, targets, alpha, gamma=2.5, size_average=False)
    assert jnp.allclose(loss2, ref2, rtol=1e-5, atol=1e-6), (loss2, ref2)

    # --- Config 3: N not a multiple of the tile -> partial-block masking. ---
    N3, C3 = 37, 10
    logits3 = jax.random.normal(k3, (N3, C3), dtype=jnp.float32)
    inputs3 = jax.nn.softmax(logits3, axis=-1)
    targets3 = jax.random.randint(k4, (N3,), 0, C3, dtype=jnp.int32)
    alpha3 = jnp.linspace(0.5, 1.5, C3, dtype=jnp.float32)
    loss3 = jax.block_until_ready(
        focal_loss(inputs3, targets3, alpha3, gamma=2.0, size_average=True,
                   tile_n=16))     # force multiple tiles + an overhanging tail
    ref3 = focal_loss_ref(inputs3, targets3, alpha3, gamma=2.0,
                          size_average=True)
    assert jnp.allclose(loss3, ref3, rtol=1e-5, atol=1e-6), (loss3, ref3)

    print("KERNEL_OK")
</pallas_src>

<mosaic_0001>
module attributes {stable_mosaic.version = 11 : i64} {
  func.func @_focal_loss_kernel(%arg0: i32, %arg1: i32, %arg2: memref<8x16xf32, #tpu.memory_space<vmem>>, %arg3: memref<8x1xi32, #tpu.memory_space<vmem>>, %arg4: memref<8x1xf32, #tpu.memory_space<vmem>>, %arg5: memref<1x1x128xf32, #tpu.memory_space<vmem>>) attributes {dimension_semantics = [#tpu.dimension_semantics<parallel>, #tpu.dimension_semantics<arbitrary>], iteration_bounds = array<i64: 1, 1>, scalar_prefetch = 0 : i64, scratch_operands = 0 : i64, tpu.core_type = #tpu.core_type<tc>, window_params = [{transform_indices = @transform_0, window_bounds = array<i64: 8, 16>}, {transform_indices = @transform_1, window_bounds = array<i64: 8, 1>}, {transform_indices = @transform_2, window_bounds = array<i64: 8, 1>}, {transform_indices = @transform_3, window_bounds = array<i64: 1, 1, 128>}]} {
    %c0_i32 = arith.constant 0 : i32
    %0 = arith.cmpi eq, %arg1, %c0_i32 : i32
    %1 = arith.extui %0 : i1 to i32
    %c0_i32_0 = arith.constant 0 : i32
    %2 = arith.cmpi ne, %1, %c0_i32_0 : i32
    scf.if %2 {
      %cst_19 = arith.constant 0.000000e+00 : f32
      %41 = vector.broadcast %cst_19 : f32 to vector<1x1x128xf32>
      %c0_20 = arith.constant 0 : index
      %c0_21 = arith.constant 0 : index
      %c0_22 = arith.constant 0 : index
      %42 = vector.load %arg5[%c0_20, %c0_21, %c0_22] : memref<1x1x128xf32, #tpu.memory_space<vmem>>, vector<1x1x128xf32>
      tpu.vector_store %arg5[%c0_20, %c0_21, %c0_22], %41 {strides = array<i32>} : memref<1x1x128xf32, #tpu.memory_space<vmem>>, vector<1x1x128xf32>,
    } else {
    }
    %c0 = arith.constant 0 : index
    %c0_1 = arith.constant 0 : index
    %3 = vector.load %arg2[%c0, %c0_1] : memref<8x16xf32, #tpu.memory_space<vmem>>, vector<8x16xf32>
    %c0_2 = arith.constant 0 : index
    %c0_3 = arith.constant 0 : index
    %4 = vector.load %arg3[%c0_2, %c0_3] : memref<8x1xi32, #tpu.memory_space<vmem>>, vector<8x1xi32>
    %c0_4 = arith.constant 0 : index
    %c0_5 = arith.constant 0 : index
    %5 = vector.load %arg4[%c0_4, %c0_5] : memref<8x1xf32, #tpu.memory_space<vmem>>, vector<8x1xf32>
    %6 = tpu.iota {dimensions = array<i32: 1>} : vector<8x16xi32>
    %7 = vector.broadcast %4 : vector<8x1xi32> to vector<8x16xi32>
    %8 = arith.cmpi eq, %6, %7 : vector<8x16xi32>
    %cst = arith.constant 0.000000e+00 : f32
    %9 = vector.broadcast %cst : f32 to vector<8x16xf32>
    %10 = arith.select %8, %3, %9 : vector<8x16xi1>, vector<8x16xf32>
    %cst_6 = arith.constant dense<0.000000e+00> : vector<8xf32>
    %11 = vector.multi_reduction <add>, %10, %cst_6 [1] : vector<8x16xf32> to vector<8xf32>
    %12 = vector.shape_cast %11 : vector<8xf32> to vector<8x1xf32>
    %13 = tpu.iota {dimensions = array<i32: 0>} : vector<8x1xi32>
    %c1_i32 = arith.constant 1 : i32
    %14 = arith.muli %arg0, %c1_i32 : i32
    %15 = arith.addi %14, %arg1 : i32
    %c8_i32 = arith.constant 8 : i32
    %16 = arith.muli %15, %c8_i32 : i32
    %17 = vector.broadcast %16 : i32 to vector<8x1xi32>
    %18 = arith.addi %17, %13 : vector<8x1xi32>
    %c8_i32_7 = arith.constant 8 : i32
    %19 = vector.broadcast %c8_i32_7 : i32 to vector<8x1xi32>
    %20 = arith.cmpi slt, %18, %19 : vector<8x1xi32>
    %cst_8 = arith.constant 1.000000e+00 : f32
    %21 = vector.broadcast %cst_8 : f32 to vector<8x1xf32>
    %22 = arith.select %20, %12, %21 : vector<8x1xi1>, vector<8x1xf32>
    %23 = math.log %22 : vector<8x1xf32>
    %cst_9 = arith.constant 1.000000e+00 : f32
    %24 = vector.broadcast %cst_9 : f32 to vector<8x1xf32>
    %25 = arith.subf %24, %22 : vector<8x1xf32>
    %26 = arith.mulf %25, %25 : vector<8x1xf32>
    %cst_10 = arith.constant 0.000000e+00 : f32
    %27 = vector.broadcast %cst_10 : f32 to vector<8x1xf32>
    %28 = arith.subf %27, %5 : vector<8x1xf32>
    %29 = arith.mulf %28, %26 : vector<8x1xf32>
    %30 = arith.mulf %29, %23 : vector<8x1xf32>
    %cst_11 = arith.constant 0.000000e+00 : f32
    %31 = vector.broadcast %cst_11 : f32 to vector<8x1xf32>
    %32 = arith.select %20, %30, %31 : vector<8x1xi1>, vector<8x1xf32>
    %c0_12 = arith.constant 0 : index
    %c0_13 = arith.constant 0 : index
    %c0_14 = arith.constant 0 : index
    %33 = vector.load %arg5[%c0_12, %c0_13, %c0_14] : memref<1x1x128xf32, #tpu.memory_space<vmem>>, vector<1x1x128xf32>
    %34 = vector.shape_cast %32 : vector<8x1xf32> to vector<1x8x1xf32>
    %cst_15 = arith.constant dense<0.000000e+00> : vector<1xf32>
    %35 = vector.multi_reduction <add>, %34, %cst_15 [1, 2] : vector<1x8x1xf32> to vector<1xf32>
    %36 = vector.shape_cast %35 : vector<1xf32> to vector<1x1x1xf32>
    %37 = vector.extract %36[0, 0, 0] : f32 from vector<1x1x1xf32>
    %38 = vector.broadcast %37 : f32 to vector<1x1x128xf32>
    %39 = arith.addf %33, %38 : vector<1x1x128xf32>
    %c0_16 = arith.constant 0 : index
    %c0_17 = arith.constant 0 : index
    %c0_18 = arith.constant 0 : index
    %40 = vector.load %arg5[%c0_16, %c0_17, %c0_18] : memref<1x1x128xf32, #tpu.memory_space<vmem>>, vector<1x1x128xf32>
    tpu.vector_store %arg5[%c0_16, %c0_17, %c0_18], %39 {strides = array<i32>} : memref<1x1x128xf32, #tpu.memory_space<vmem>>, vector<1x1x128xf32>,
    return
  }
  func.func @transform_0(%arg0: i32, %arg1: i32) -> (i32, i32) {
    %c1_i32 = arith.constant 1 : i32
    %0 = arith.muli %arg0, %c1_i32 : i32
    %1 = arith.addi %0, %arg1 : i32
    %c0_i32 = arith.constant 0 : i32
    %2 = arith.minsi %1, %c0_i32 : i32
    %c0_i32_0 = arith.constant 0 : i32
    %c0_i32_1 = arith.constant 0 : i32
    return %2, %c0_i32_0 : i32, i32
  }
  func.func @transform_1(%arg0: i32, %arg1: i32) -> (i32, i32) {
    %c1_i32 = arith.constant 1 : i32
    %0 = arith.muli %arg0, %c1_i32 : i32
    %1 = arith.addi %0, %arg1 : i32
    %c0_i32 = arith.constant 0 : i32
    %2 = arith.minsi %1, %c0_i32 : i32
    %c0_i32_0 = arith.constant 0 : i32
    %c0_i32_1 = arith.constant 0 : i32
    return %2, %c0_i32_0 : i32, i32
  }
  func.func @transform_2(%arg0: i32, %arg1: i32) -> (i32, i32) {
    %c1_i32 = arith.constant 1 : i32
    %0 = arith.muli %arg0, %c1_i32 : i32
    %1 = arith.addi %0, %arg1 : i32
    %c0_i32 = arith.constant 0 : i32
    %2 = arith.minsi %1, %c0_i32 : i32
    %c0_i32_0 = arith.constant 0 : i32
    %c0_i32_1 = arith.constant 0 : i32
    return %2, %c0_i32_0 : i32, i32
  }
  func.func @transform_3(%arg0: i32, %arg1: i32) -> (i32, i32, i32) {
    %c0_i32 = arith.constant 0 : i32
    %c0_i32_0 = arith.constant 0 : i32
    %c0_i32_1 = arith.constant 0 : i32
    return %arg0, %c0_i32, %c0_i32_0 : i32, i32, i32
  }
}

</mosaic_0001>

<llo_original>
// kernel: tpu_custom_call.1
$region0: #{tpu_custom_call.1}
  #allocation0 [shape = 'u32[]', space=smem, size = 0x4, offset = 0x4, fixed_abs, tag = 'smem constant byte address 0x4 - core index']
  #allocation1 [shape = 'u32[144,128]{1,0:T(1,128)}', space=vmem, size = 0x12000, scoped, tag = 'internal scratch']
  %s0 = inlined_call_operand.vmem [shape: f32[8,16], index: 0, kind: input, shape index: {}]
  %s1 = inlined_call_operand.vmem [shape: s32[8,1], index: 1, kind: input, shape index: {}]
  %s2 = inlined_call_operand.vmem [shape: f32[8,1], index: 2, kind: input, shape index: {}]
  %s3 = inlined_call_operand.hbm [shape: f32[1,1,128], index: 3, kind: output, shape index: {}]
  %s4 = sld [smem:[#allocation0]]
  $region26: #{tpu_custom_call.1} parent=0
    _
  %s6 = ssub.s32 1, %s4
  %s7 = scalar_select 0, %s6, %s4
  $region1: #{tpu_custom_call.1} parent=0
    #allocation2 [shape = 'u8[512]{0}', space=vmem, size = 0x400, scoped, tag = 'output window, operand 0, single buffered']
    #allocation3 [shape = 's32[1]{0}', space=sflag, size = 0x4, scoped, tag = 'scoped memory for tpu_custom_call.1']
    %8 = vsyncpa [#allocation3], 0
    // Predicated region
    $region2: #{tpu_custom_call.1} parent=1 // pred_check
      _
    $region3: #{tpu_custom_call.1} parent=1 // pred_check_branch
      %10 = sbr.rel (0) target = $region5
    $region4: #{tpu_custom_call.1} parent=1 // pred_region
      %s11 = sadd.s32 0, 0
      %p12 = scmp.lt.s32.totalorder %s11, 0
      %s13 = scalar_select %p12, %s11, 0
      %p14 = scmp.lt.s32.totalorder %s13, 0
      %s15 = scalar_select %p14, %s13, 0
      %s16 = smul.addr %s15, 8
      %s17 = scalar_lea.vmem %s0, %s16
      %s18 = sadd.s32 0, 0
      %p19 = scmp.lt.s32.totalorder %s18, 0
      %s20 = scalar_select %p19, %s18, 0
    $region5: #{tpu_custom_call.1} parent=1 // pred_fallthru
      _
    // Predicated region
    $region6: #{tpu_custom_call.1} parent=1 // pred_check
      _
    $region7: #{tpu_custom_call.1} parent=1 // pred_check_branch
      %22 = sbr.rel (0) target = $region9
    $region8: #{tpu_custom_call.1} parent=1 // pred_region
      %s23 = sadd.s32 0, 0
      %p24 = scmp.lt.s32.totalorder %s23, 0
      %s25 = scalar_select %p24, %s23, 0
      %p26 = scmp.lt.s32.totalorder %s25, 0
      %s27 = scalar_select %p26, %s25, 0
      %s28 = smul.addr %s27, 8
      %s29 = scalar_lea.vmem %s1, %s28
      %s30 = sadd.s32 0, 0
      %p31 = scmp.lt.s32.totalorder %s30, 0
      %s32 = scalar_select %p31, %s30, 0
    $region9: #{tpu_custom_call.1} parent=1 // pred_fallthru
      _
    // Predicated region
    $region10: #{tpu_custom_call.1} parent=1 // pred_check
      _
    $region11: #{tpu_custom_call.1} parent=1 // pred_check_branch
      %34 = sbr.rel (0) target = $region13
    $region12: #{tpu_custom_call.1} parent=1 // pred_region
      %s35 = sadd.s32 0, 0
      %p36 = scmp.lt.s32.totalorder %s35, 0
      %s37 = scalar_select %p36, %s35, 0
      %p38 = scmp.lt.s32.totalorder %s37, 0
      %s39 = scalar_select %p38, %s37, 0
      %s40 = smul.addr %s39, 8
      %s41 = scalar_lea.vmem %s2, %s40
      %s42 = sadd.s32 0, 0
      %p43 = scmp.lt.s32.totalorder %s42, 0
      %s44 = scalar_select %p43, %s42, 0
    $region13: #{tpu_custom_call.1} parent=1 // pred_fallthru
      _
    %s45 = sadd.s32 0, 0
    %p46 = scmp.lt.s32.totalorder %s45, 0
    %s47 = scalar_select %p46, %s45, 0
    %p48 = scmp.lt.s32.totalorder %s47, 0
    %s49 = scalar_select %p48, %s47, 0
    %s50 = smul.addr %s49, 8
    %s51 = scalar_lea.vmem %s0, %s50
    %s52 = sadd.s32 0, 0
    %p53 = scmp.lt.s32.totalorder %s52, 0
    %s54 = scalar_select %p53, %s52, 0
    %p55 = scmp.lt.s32.totalorder %s54, 0
    %s56 = scalar_select %p55, %s54, 0
    %s57 = smul.addr %s56, 8
    %s58 = scalar_lea.vmem %s1, %s57
    %s59 = sadd.s32 0, 0
    %p60 = scmp.lt.s32.totalorder %s59, 0
    %s61 = scalar_select %p60, %s59, 0
    %p62 = scmp.lt.s32.totalorder %s61, 0
    %s63 = scalar_select %p62, %s61, 0
    %s64 = smul.addr %s63, 8
    %s65 = scalar_lea.vmem %s2, %s64
    %s66 = sadd.s32 0, 0
    %p67 = scmp.lt.s32.totalorder %s66, 0
    %s68 = scalar_select %p67, %s66, 0
    %p69 = scmp.lt.s32.totalorder %s68, 0
    %s70 = scalar_select %p69, %s68, 0
    %s71 = smul.addr %s70, 8
    %s72 = scalar_lea.vmem %s0, %s71
    %s73 = sadd.s32 0, 0
    %p74 = scmp.lt.s32.totalorder %s73, 0
    %s75 = scalar_select %p74, %s73, 0
    %s76 = sadd.s32 0, 0
    %p77 = scmp.lt.s32.totalorder %s76, 0
    %s78 = scalar_select %p77, %s76, 0
    %p79 = scmp.lt.s32.totalorder %s78, 0
    %s80 = scalar_select %p79, %s78, 0
    %s81 = smul.addr %s80, 8
    %s82 = scalar_lea.vmem %s1, %s81
    %s83 = sadd.s32 0, 0
    %p84 = scmp.lt.s32.totalorder %s83, 0
    %s85 = scalar_select %p84, %s83, 0
    %s86 = sadd.s32 0, 0
    %p87 = scmp.lt.s32.totalorder %s86, 0
    %s88 = scalar_select %p87, %s86, 0
    %p89 = scmp.lt.s32.totalorder %s88, 0
    %s90 = scalar_select %p89, %s88, 0
    %s91 = smul.addr %s90, 8
    %s92 = scalar_lea.vmem %s2, %s91
    %s93 = sadd.s32 0, 0
    %p94 = scmp.lt.s32.totalorder %s93, 0
    %s95 = scalar_select %p94, %s93, 0
    %p96 = scmp.eq.s32.totalorder 0, 0
    // Predicated region
    $region14: #{tpu_custom_call.1} parent=1 // pred_check
      %p97 = pneg %p96
    $region15: #{tpu_custom_call.1} parent=1 // pred_check_branch
      %99 = sbr.rel (%p97) target = $region17
    $region16: #{tpu_custom_call.1} parent=1 // pred_region
      %100 = vst [vmem:[#allocation2] sm:$0x1] 0.0
    $region17: #{tpu_custom_call.1} parent=1 // pred_fallthru
      _
    %v101 = vld [vmem:[%s72] sm:$0xff]
    %v102 = vld [vmem:[%s82] sm:$0xff]
    %v103 = vld [vmem:[%s92] sm:$0xff]
    %v104 = vlaneseq
    %v105 = vand.u32 %v104, 127
    %106 = vset.pattern.permute.xlu0 0
    %107 = vperm.xlu0 %106, %v102
    %v108 = vpop.permute.xlu0 %107
    %vm109 = vcmp.eq.s32.totalorder %v105, %v108
    %v110 = vsel %vm109, %v101, 0.0
    %vm111 = vcmask 130048
    %v112 = vsel %vm111, %v110, 0.0
    %113 = vadd.xlane.f32.xlu0 %v112
    %v114 = vpop.xlane.xlu0 %113
    %v115 = vlaneseq
    %v116 = vshrl.u32 %v115, 7
    %s117 = sadd.s32 0, 0
    %s118 = smul.u32 %s117, 8
    %v119 = vstv %s118
    %v120 = vadd.s32 %v119, %v116
    %vm121 = vcmp.lt.s32.totalorder %v120, 8
    %v122 = vsel %vm121, %v114, 1.0
    %v123 = vlog2.pop %v122
    %v124 = vmul.f32 %v123, 0.6931472
    %v125 = vsub.f32 1.0, %v122
    %v126 = vmul.f32 %v125, %v125
    %v127 = vsub.f32 0.0, %v103
    %v128 = vmul.f32 %v127, %v126
    %v129 = vmul.f32 %v128, %v124
    %v130 = vsel %vm121, %v129, 0.0
    %v131 = vld [vmem:[#allocation2] sm:$0x1]
    %vm132 = vcmask 7168
    %v133 = vsel %vm132, %v130, 0.0
    %134 = vadd.xlane.f32.xlu0 %v133
    %v135 = vpop.xlane.xlu0 %134
    %v136 = vrot.slane %v135, 4
    %v137 = vadd.f32 %v135, %v136
    %v138 = vrot.slane %v137, 2
    %v139 = vadd.f32 %v137, %v138
    %v140 = vrot.slane %v139, 1
    %v141 = vadd.f32 %v139, %v140
    %s142 = vtos %v141
    %v143 = vstv %s142
    %v144 = vadd.f32 %v131, %v143
    %145 = vst [vmem:[#allocation2] sm:$0x1] %v144
    // Predicated region
    $region18: #{tpu_custom_call.1} parent=1 // pred_check
      _
    $region19: #{tpu_custom_call.1} parent=1 // pred_check_branch
      %147 = sbr.rel (0) target = $region21
    $region20: #{tpu_custom_call.1} parent=1 // pred_region
      %s149 = ssub.s32 16, 16
      %150 = vsyncadd [#allocation3], %s149
      %s152 = sshll.u32 [#allocation2], 4
      %s153 = int_to_ptr.vmem [resolvable:$true] %s152
      %155 = dma.vmem_to_hbm [thread:$0]  %s153, 16, %s3, [#allocation3]
    $region21: #{tpu_custom_call.1} parent=1 // pred_fallthru
      _
    // Predicated region
    $region22: #{tpu_custom_call.1} parent=1 // pred_check
      _
    $region23: #{tpu_custom_call.1} parent=1 // pred_check_branch
      %157 = sbr.rel (0) target = $region25
    $region24: #{tpu_custom_call.1} parent=1 // pred_region
      %158 = dma.done [#allocation3], 16
    $region25: #{tpu_custom_call.1} parent=1 // pred_fallthru
      _
    %159 = vsyncpa [#allocation3], 1

</llo_original>
